<compile_context>
chip_gen: v7x
topology: tpu7x:2x2x1
jax: 0.10.0
libtpu: 0.0.40
codegen_flags: <defaults>
</compile_context>

<pallas_src>
import jax
import jax.numpy as jnp
from jax.experimental import pallas as pl
from jax.experimental.pallas import tpu as pltpu


def make_gcn_kernel(in_dim, hidden, hidden2, n_classes):
    # static row offsets into the packed weight buffer
    r_w1 = 0
    r_w2 = in_dim
    r_wc = in_dim + hidden
    r_end = in_dim + hidden + hidden2
    # static lane offsets into the packed bias row
    c_b1 = 0
    c_b2 = hidden
    c_bc = hidden + hidden2

    def gcn_kernel(adj_ref, x_ref, w_ref, b_ref, out_ref):
        adj = adj_ref[...]                       # [N, N] normalized adjacency
        x = x_ref[...]                           # [N, in_dim]

        # static slices of the packed parameter buffers (cheap in-VMEM views/loads)
        w1 = w_ref[r_w1:r_w2, :hidden]           # [in_dim, hidden]
        w2 = w_ref[r_w2:r_wc, :hidden2]          # [hidden, hidden2]
        wc = w_ref[r_wc:r_end, :n_classes]       # [hidden2, n_classes]  (already /N scaled)
        b1 = b_ref[:, c_b1:c_b1 + hidden]        # [1, hidden]
        b2 = b_ref[:, c_b2:c_b2 + hidden2]       # [1, hidden2]
        bc = b_ref[:, c_bc:c_bc + n_classes]     # [1, n_classes] (fused classifier bias)

        # --- GraphConv 1: aggregate first (in_dim < hidden): relu((Â X) W1 + b1) ---
        ax = jnp.dot(adj, x, preferred_element_type=jnp.float32)
        h1 = jnp.dot(ax, w1, preferred_element_type=jnp.float32) + b1
        h1 = jnp.maximum(h1, 0.0)

        # --- GraphConv 2: transform first (hidden2 < hidden): relu(Â (H1 W2) + b2) ---
        hw = jnp.dot(h1, w2, preferred_element_type=jnp.float32)
        h2 = jnp.dot(adj, hw, preferred_element_type=jnp.float32) + b2
        h2 = jnp.maximum(h2, 0.0)

        # --- dgl.mean_nodes: sublane sum-reduce; the 1/N scale is folded into wc ---
        hg = jnp.sum(h2, axis=0, keepdims=True)  # [1, hidden2]

        # --- fused 4-layer classifier: single matmul + bias ---
        z = jnp.dot(hg, wc, preferred_element_type=jnp.float32) + bc
        out_ref[...] = z.astype(out_ref.dtype)

    return gcn_kernel


def two_conv_four_classi_gcn(adj_norm, x, params, n_classes):
    (w1, b1, w2, b2,
     wc1, bc1, wc2, bc2, wc3, bc3, wc4, bc4) = params

    n_nodes, in_dim = x.shape
    hidden = w1.shape[1]
    hidden2 = w2.shape[1]

    # Algebraic fusion of the 4 Linear layers (no activations between them):
    #   z = ((hg Wc1 + bc1) Wc2 + bc2) Wc3 + bc3) Wc4 + bc4  ==  hg (Wc1 Wc2 Wc3 Wc4) + bc_fused
    wc = w_fused = wc1 @ wc2 @ wc3 @ wc4                              # [hidden2, n_classes]
    bc = ((bc1 @ wc2 + bc2) @ wc3 + bc3) @ wc4 + bc4                  # [1, n_classes]
    # Fold mean_nodes' 1/N into the fused weight so the kernel only needs a sum-reduce.
    wc = w_fused / jnp.float32(n_nodes)

    # Pack weights into one row-stacked, lane-padded buffer; biases into one row.
    max_out = max(hidden, hidden2, n_classes)
    pad = lambda w: jnp.pad(w, ((0, 0), (0, max_out - w.shape[1])))
    w_pack = jnp.concatenate([pad(w1), pad(w2), pad(wc)], axis=0)     # [in+hid+hid2, max_out]
    b_pack = jnp.concatenate([b1, b2, bc], axis=1)                    # [1, hid+hid2+ncls]

    kernel = make_gcn_kernel(in_dim, hidden, hidden2, n_classes)

    flops = 2 * (n_nodes * n_nodes * in_dim          # Â X
                 + n_nodes * in_dim * hidden         # (ÂX) W1
                 + n_nodes * hidden * hidden2        # H1 W2
                 + n_nodes * n_nodes * hidden2       # Â (H1 W2)
                 + hidden2 * n_classes)              # fused head
    bytes_accessed = 4 * (adj_norm.size + x.size + w_pack.size + b_pack.size + n_classes)
    cost = pl.CostEstimate(flops=flops, transcendentals=0, bytes_accessed=bytes_accessed)

    vmem = pl.BlockSpec(memory_space=pltpu.MemorySpace.VMEM)
    return pl.pallas_call(
        kernel,
        out_shape=jax.ShapeDtypeStruct((1, n_classes), jnp.float32),
        in_specs=[vmem, vmem, vmem, vmem],
        out_specs=vmem,
        cost_estimate=cost,
    )(adj_norm, x, w_pack, b_pack)


def init_params(key, in_dim, hidden, hidden2, n_classes):
    """Deterministic uniform(-1/sqrt(fan_in), +1/sqrt(fan_in)) init (PyTorch-like)."""
    dims = [(in_dim, hidden), (hidden, hidden2),
            (hidden2, 18), (18, 12), (12, 6), (6, n_classes)]
    params = []
    for i, (din, dout) in enumerate(dims):
        k_w, k_b = jax.random.split(jax.random.fold_in(key, i))
        scale = 1.0 / float(din) ** 0.5
        w = jax.random.uniform(k_w, (din, dout), jnp.float32, -scale, scale)
        b = jax.random.uniform(k_b, (1, dout), jnp.float32, -scale, scale)
        params += [w, b]
    return params


def build_graph(key, n_nodes):
    """Deterministic dense graph; returns Â[dst, src] = D_in^{-1/2} A D_out^{-1/2} (DGL 'both' norm)."""
    a = (jax.random.uniform(key, (n_nodes, n_nodes)) < 0.3).astype(jnp.float32)
    a = jnp.minimum(a + jnp.eye(n_nodes, dtype=jnp.float32), 1.0)  # self-loops avoid zero degree
    deg_in = a.sum(axis=1)   # dst in-degree  (row sums)
    deg_out = a.sum(axis=0)  # src out-degree (col sums)
    return (deg_in ** -0.5)[:, None] * a * (deg_out ** -0.5)[None, :]


if __name__ == "__main__":
    N, in_dim, hidden, hidden2, n_classes = 16, 8, 32, 16, 4

    key = jax.random.PRNGKey(0)
    k_adj, k_x, k_p = jax.random.split(key, 3)

    adj_norm = build_graph(k_adj, N)                       # [N, N]
    x = jax.random.normal(k_x, (N, in_dim), jnp.float32)   # [N, in_dim]
    params = init_params(k_p, in_dim, hidden, hidden2, n_classes)

    out = two_conv_four_classi_gcn(adj_norm, x, params, n_classes)
    out = jax.block_until_ready(out)
    assert out.shape == (1, n_classes)
    print("KERNEL_OK")
</pallas_src>

<mosaic_0001>
module attributes {stable_mosaic.version = 11 : i64} {
  func.func @gcn_kernel(%arg0: memref<16x16xf32, #tpu.memory_space<vmem>>, %arg1: memref<16x8xf32, #tpu.memory_space<vmem>>, %arg2: memref<56x32xf32, #tpu.memory_space<vmem>>, %arg3: memref<1x52xf32, #tpu.memory_space<vmem>>, %arg4: memref<1x4xf32, #tpu.memory_space<vmem>>) attributes {dimension_semantics = [], scalar_prefetch = 0 : i64, scratch_operands = 0 : i64, tpu.core_type = #tpu.core_type<tc>} {
    %c0 = arith.constant 0 : index
    %c0_0 = arith.constant 0 : index
    %0 = vector.load %arg0[%c0, %c0_0] : memref<16x16xf32, #tpu.memory_space<vmem>>, vector<16x16xf32>
    %c0_1 = arith.constant 0 : index
    %c0_2 = arith.constant 0 : index
    %1 = vector.load %arg1[%c0_1, %c0_2] : memref<16x8xf32, #tpu.memory_space<vmem>>, vector<16x8xf32>
    %c0_3 = arith.constant 0 : index
    %c0_4 = arith.constant 0 : index
    %2 = vector.load %arg2[%c0_3, %c0_4] : memref<56x32xf32, #tpu.memory_space<vmem>>, vector<8x32xf32>
    %c8 = arith.constant 8 : index
    %c0_5 = arith.constant 0 : index
    %3 = vector.load %arg2[%c8, %c0_5] : memref<56x32xf32, #tpu.memory_space<vmem>>, vector<32x16xf32>
    %c40 = arith.constant 40 : index
    %c0_6 = arith.constant 0 : index
    %4 = vector.load %arg2[%c40, %c0_6] : memref<56x32xf32, #tpu.memory_space<vmem>>, vector<16x4xf32>
    %c0_7 = arith.constant 0 : index
    %c0_8 = arith.constant 0 : index
    %5 = vector.load %arg3[%c0_7, %c0_8] : memref<1x52xf32, #tpu.memory_space<vmem>>, vector<1x32xf32>
    %c0_9 = arith.constant 0 : index
    %c32 = arith.constant 32 : index
    %6 = vector.load %arg3[%c0_9, %c32] : memref<1x52xf32, #tpu.memory_space<vmem>>, vector<1x16xf32>
    %c0_10 = arith.constant 0 : index
    %c48 = arith.constant 48 : index
    %7 = vector.load %arg3[%c0_10, %c48] : memref<1x52xf32, #tpu.memory_space<vmem>>, vector<1x4xf32>
    %cst = arith.constant dense<0.000000e+00> : vector<16x8xf32>
    %8 = tpu.matmul %0, %1, %cst {dimension_numbers = #tpu.dot_dimension_numbers<[1], [0], [0], [1], [0, 0, 1, 1], [], []>} : vector<16x16xf32>, vector<16x8xf32>, vector<16x8xf32> -> vector<16x8xf32>
    %cst_11 = arith.constant dense<0.000000e+00> : vector<16x32xf32>
    %9 = tpu.matmul %8, %2, %cst_11 {dimension_numbers = #tpu.dot_dimension_numbers<[1], [0], [0], [1], [0, 0, 1, 1], [], []>} : vector<16x8xf32>, vector<8x32xf32>, vector<16x32xf32> -> vector<16x32xf32>
    %10 = vector.broadcast %5 : vector<1x32xf32> to vector<16x32xf32>
    %11 = arith.addf %9, %10 : vector<16x32xf32>
    %cst_12 = arith.constant 0.000000e+00 : f32
    %12 = vector.broadcast %cst_12 : f32 to vector<16x32xf32>
    %13 = arith.maximumf %11, %12 : vector<16x32xf32>
    %cst_13 = arith.constant dense<0.000000e+00> : vector<16x16xf32>
    %14 = tpu.matmul %13, %3, %cst_13 {dimension_numbers = #tpu.dot_dimension_numbers<[1], [0], [0], [1], [0, 0, 1, 1], [], []>} : vector<16x32xf32>, vector<32x16xf32>, vector<16x16xf32> -> vector<16x16xf32>
    %cst_14 = arith.constant dense<0.000000e+00> : vector<16x16xf32>
    %15 = tpu.matmul %0, %14, %cst_14 {dimension_numbers = #tpu.dot_dimension_numbers<[1], [0], [0], [1], [0, 0, 1, 1], [], []>} : vector<16x16xf32>, vector<16x16xf32>, vector<16x16xf32> -> vector<16x16xf32>
    %16 = vector.broadcast %6 : vector<1x16xf32> to vector<16x16xf32>
    %17 = arith.addf %15, %16 : vector<16x16xf32>
    %cst_15 = arith.constant 0.000000e+00 : f32
    %18 = vector.broadcast %cst_15 : f32 to vector<16x16xf32>
    %19 = arith.maximumf %17, %18 : vector<16x16xf32>
    %cst_16 = arith.constant dense<0.000000e+00> : vector<16xf32>
    %20 = vector.multi_reduction <add>, %19, %cst_16 [0] : vector<16x16xf32> to vector<16xf32>
    %21 = vector.shape_cast %20 : vector<16xf32> to vector<1x16xf32>
    %cst_17 = arith.constant dense<0.000000e+00> : vector<1x4xf32>
    %22 = tpu.matmul %21, %4, %cst_17 {dimension_numbers = #tpu.dot_dimension_numbers<[1], [0], [0], [1], [0, 0, 1, 1], [], []>} : vector<1x16xf32>, vector<16x4xf32>, vector<1x4xf32> -> vector<1x4xf32>
    %23 = arith.addf %22, %7 : vector<1x4xf32>
    %c0_18 = arith.constant 0 : index
    %c0_19 = arith.constant 0 : index
    %24 = vector.load %arg4[%c0_18, %c0_19] : memref<1x4xf32, #tpu.memory_space<vmem>>, vector<1x4xf32>
    tpu.vector_store %arg4[%c0_18, %c0_19], %23 {strides = array<i32>} : memref<1x4xf32, #tpu.memory_space<vmem>>, vector<1x4xf32>,
    return
  }
}

</mosaic_0001>

<llo_original>
// kernel: tpu_custom_call.1
$region0: #{tpu_custom_call.1}
  #allocation0 [shape = 'u32[]', space=smem, size = 0x4, offset = 0x4, fixed_abs, tag = 'smem constant byte address 0x4 - core index']
  #allocation1 [shape = 'u32[144,128]{1,0:T(1,128)}', space=vmem, size = 0x12000, scoped, tag = 'internal scratch']
  %s0 = inlined_call_operand.vmem [shape: f32[16,16], index: 0, kind: input, shape index: {}]
  %s1 = inlined_call_operand.vmem [shape: f32[16,8], index: 1, kind: input, shape index: {}]
  %s2 = inlined_call_operand.vmem [shape: f32[56,32], index: 2, kind: input, shape index: {}]
  %s3 = inlined_call_operand.vmem [shape: f32[1,52], index: 3, kind: input, shape index: {}]
  %s4 = inlined_call_operand.hbm [shape: f32[1,4], index: 4, kind: output, shape index: {}]
  %s5 = sld [smem:[#allocation0]]
  $region26: #{tpu_custom_call.1} parent=0
    _
  %s7 = ssub.s32 1, %s5
  %s8 = scalar_select 0, %s7, %s5
  $region1: #{tpu_custom_call.1} parent=0
    #allocation2 [shape = 'u8[512]{0}', space=vmem, size = 0x400, scoped, tag = 'output window, operand 0, single buffered']
    #allocation3 [shape = 's32[1]{0}', space=sflag, size = 0x4, scoped, tag = 'scoped memory for tpu_custom_call.1']
    %9 = vsyncpa [#allocation3], 0
    // Predicated region
    $region2: #{tpu_custom_call.1} parent=1 // pred_check
      _
    $region3: #{tpu_custom_call.1} parent=1 // pred_check_branch
      %11 = sbr.rel (0) target = $region5
    $region4: #{tpu_custom_call.1} parent=1 // pred_region
      _
    $region5: #{tpu_custom_call.1} parent=1 // pred_fallthru
      _
    // Predicated region
    $region6: #{tpu_custom_call.1} parent=1 // pred_check
      _
    $region7: #{tpu_custom_call.1} parent=1 // pred_check_branch
      %13 = sbr.rel (0) target = $region9
    $region8: #{tpu_custom_call.1} parent=1 // pred_region
      _
    $region9: #{tpu_custom_call.1} parent=1 // pred_fallthru
      _
    // Predicated region
    $region10: #{tpu_custom_call.1} parent=1 // pred_check
      _
    $region11: #{tpu_custom_call.1} parent=1 // pred_check_branch
      %15 = sbr.rel (0) target = $region13
    $region12: #{tpu_custom_call.1} parent=1 // pred_region
      _
    $region13: #{tpu_custom_call.1} parent=1 // pred_fallthru
      _
    // Predicated region
    $region14: #{tpu_custom_call.1} parent=1 // pred_check
      _
    $region15: #{tpu_custom_call.1} parent=1 // pred_check_branch
      %17 = sbr.rel (0) target = $region17
    $region16: #{tpu_custom_call.1} parent=1 // pred_region
      _
    $region17: #{tpu_custom_call.1} parent=1 // pred_fallthru
      _
    %v18 = vld [vmem:[%s0] sm:$0xff]
    %v19 = vld [vmem:[%s0 + $0x8] sm:$0xff]
    %v20 = vld [vmem:[%s1] sm:$0xff]
    %v21 = vld [vmem:[%s1 + $0x8] sm:$0xff]
    %v22 = vld [vmem:[%s2] sm:$0xff]
    %v23 = vld [vmem:[%s2 + $0x8] sm:$0xff]
    %v24 = vld [vmem:[%s2 + $0x10] sm:$0xff]
    %v25 = vld [vmem:[%s2 + $0x18] sm:$0xff]
    %v26 = vld [vmem:[%s2 + $0x20] sm:$0xff]
    %v27 = vld [vmem:[%s2 + $0x28] sm:$0xff]
    %v28 = vld [vmem:[%s2 + $0x30] sm:$0xff]
    %v29 = vld [vmem:[%s3] sm:$0x1]
    %vm30 = vcmask 130048
    %v32 = vsel %vm30, %v18, 0
    %v35 = vsel %vm30, %v19, 0
    %37 = vmatprep.subr.mxu0 0.0
    %38 = vmatpush1.msra.mxu0 %v20
    %39 = vmatprep.subr.mxu0 0.0
    %40 = vmatpush1.msra.mxu0 %v21
    %41 = vmatprep.subr.mxu0 0.0
    %42 = vmatpush1.msra.mxu0 0.0
    %43 = vmatprep.subr.mxu0 0.0
    %44 = vmatpush1.msra.mxu0 0.0
    %45 = vmatprep.subr.mxu0 0.0
    %46 = vmatpush1.msra.mxu0 0.0
    %47 = vmatprep.subr.mxu0 0.0
    %48 = vmatpush1.msra.mxu0 0.0
    %49 = vmatprep.subr.mxu0 0.0
    %50 = vmatpush1.msra.mxu0 0.0
    %51 = vmatprep.subr.mxu0 0.0
    %52 = vmatpush1.msra.mxu0 0.0
    %53 = vmatprep.subr.mxu0 0.0
    %54 = vmatpush1.msra.mxu0 0.0
    %55 = vmatprep.subr.mxu0 0.0
    %56 = vmatpush1.msra.mxu0 0.0
    %57 = vmatprep.subr.mxu0 0.0
    %58 = vmatpush1.msra.mxu0 0.0
    %59 = vmatprep.subr.mxu0 0.0
    %60 = vmatpush1.msra.mxu0 0.0
    %61 = vmatprep.subr.mxu0 0.0
    %62 = vmatpush1.msra.mxu0 0.0
    %63 = vmatprep.subr.mxu0 0.0
    %64 = vmatpush1.msra.mxu0 0.0
    %65 = vmatprep.subr.mxu0 0.0
    %66 = vmatpush1.msra.mxu0 0.0
    %67 = vmatprep.subr.mxu0 0.0
    %68 = vmatpush1.msra.mxu0 0.0
    %69 = vmatprep.subr.mxu0 0.0
    %70 = vmatpush1.msra.mxu0 0.0
    %71 = vmatprep.subr.mxu0 0.0
    %72 = vmatpush1.msra.mxu0 0.0
    %73 = vmatprep.subr.mxu0 0.0
    %74 = vmatpush1.msra.mxu0 0.0
    %75 = vmatprep.subr.mxu0 0.0
    %76 = vmatpush1.msra.mxu0 0.0
    %77 = vmatprep.subr.mxu0 0.0
    %78 = vmatpush1.msra.mxu0 0.0
    %79 = vmatprep.subr.mxu0 0.0
    %80 = vmatpush1.msra.mxu0 0.0
    %81 = vmatprep.subr.mxu0 0.0
    %82 = vmatpush1.msra.mxu0 0.0
    %83 = vmatprep.subr.mxu0 0.0
    %84 = vmatpush1.msra.mxu0 0.0
    %85 = vmatprep.subr.mxu0 0.0
    %86 = vmatpush1.msra.mxu0 0.0
    %87 = vmatprep.subr.mxu0 0.0
    %88 = vmatpush1.msra.mxu0 0.0
    %89 = vmatprep.subr.mxu0 0.0
    %90 = vmatpush1.msra.mxu0 0.0
    %91 = vmatprep.subr.mxu0 0.0
    %92 = vmatpush1.msra.mxu0 0.0
    %93 = vmatprep.subr.mxu0 0.0
    %94 = vmatpush1.msra.mxu0 0.0
    %95 = vmatprep.subr.mxu0 0.0
    %96 = vmatpush1.msra.mxu0 0.0
    %97 = vmatprep.subr.mxu0 0.0
    %98 = vmatpush1.msra.mxu0 0.0
    %99 = vmatprep.subr.mxu0 0.0
    %100 = vmatpush1.msra.mxu0 0.0
    %101 = vmatprep.mubr.f32.mxu0 0.0
    %102 = vmatmul.mubr.f32.gmra.mrb[0].mxu0 %v32
    %v103 = vpop.f32.mrb[0].mxu0
    %v104 = vadd.f32 0.0, %v103
    %v105 = vpop.f32.mrb[0].mxu0
    %106 = vmatprep.mubr.f32.mxu0 0.0
    %107 = vmatmul.mubr.f32.gmra.mrb[0].mxu0 %v35
    %v108 = vpop.f32.mrb[0].mxu0
    %v109 = vadd.f32 0.0, %v108
    %v110 = vpop.f32.mrb[0].mxu0
    %111 = vdwg.mxu0
    %v113 = vlaneseq
    %v114 = vshrl.u32 %v113, 7
    %v115 = vsub.s32 0, %v114
    %v116 = vrot.slane %v29, %v115
    %vm118 = vcmask 64512
    %v120 = vsel %vm118, %v104, 0
    %v123 = vsel %vm118, %v109, 0
    %125 = vmatprep.subr.mxu0 0.0
    %126 = vmatpush1.msra.mxu0 %v22
    %127 = vmatprep.subr.mxu0 0.0
    %128 = vmatpush1.msra.mxu0 0.0
    %129 = vmatprep.subr.mxu0 0.0
    %130 = vmatpush1.msra.mxu0 0.0
    %131 = vmatprep.subr.mxu0 0.0
    %132 = vmatpush1.msra.mxu0 0.0
    %133 = vmatprep.subr.mxu0 0.0
    %134 = vmatpush1.msra.mxu0 0.0
    %135 = vmatprep.subr.mxu0 0.0
    %136 = vmatpush1.msra.mxu0 0.0
    %137 = vmatprep.subr.mxu0 0.0
    %138 = vmatpush1.msra.mxu0 0.0
    %139 = vmatprep.subr.mxu0 0.0
    %140 = vmatpush1.msra.mxu0 0.0
    %141 = vmatprep.subr.mxu0 0.0
    %142 = vmatpush1.msra.mxu0 0.0
    %143 = vmatprep.subr.mxu0 0.0
    %144 = vmatpush1.msra.mxu0 0.0
    %145 = vmatprep.subr.mxu0 0.0
    %146 = vmatpush1.msra.mxu0 0.0
    %147 = vmatprep.subr.mxu0 0.0
    %148 = vmatpush1.msra.mxu0 0.0
    %149 = vmatprep.subr.mxu0 0.0
    %150 = vmatpush1.msra.mxu0 0.0
    %151 = vmatprep.subr.mxu0 0.0
    %152 = vmatpush1.msra.mxu0 0.0
    %153 = vmatprep.subr.mxu0 0.0
    %154 = vmatpush1.msra.mxu0 0.0
    %155 = vmatprep.subr.mxu0 0.0
    %156 = vmatpush1.msra.mxu0 0.0
    %157 = vmatprep.subr.mxu0 0.0
    %158 = vmatpush1.msra.mxu0 0.0
    %159 = vmatprep.subr.mxu0 0.0
    %160 = vmatpush1.msra.mxu0 0.0
    %161 = vmatprep.subr.mxu0 0.0
    %162 = vmatpush1.msra.mxu0 0.0
    %163 = vmatprep.subr.mxu0 0.0
    %164 = vmatpush1.msra.mxu0 0.0
    %165 = vmatprep.subr.mxu0 0.0
    %166 = vmatpush1.msra.mxu0 0.0
    %167 = vmatprep.subr.mxu0 0.0
    %168 = vmatpush1.msra.mxu0 0.0
    %169 = vmatprep.subr.mxu0 0.0
    %170 = vmatpush1.msra.mxu0 0.0
    %171 = vmatprep.subr.mxu0 0.0
    %172 = vmatpush1.msra.mxu0 0.0
    %173 = vmatprep.subr.mxu0 0.0
    %174 = vmatpush1.msra.mxu0 0.0
    %175 = vmatprep.subr.mxu0 0.0
    %176 = vmatpush1.msra.mxu0 0.0
    %177 = vmatprep.subr.mxu0 0.0
    %178 = vmatpush1.msra.mxu0 0.0
    %179 = vmatprep.subr.mxu0 0.0
    %180 = vmatpush1.msra.mxu0 0.0
    %181 = vmatprep.subr.mxu0 0.0
    %182 = vmatpush1.msra.mxu0 0.0
    %183 = vmatprep.subr.mxu0 0.0
    %184 = vmatpush1.msra.mxu0 0.0
    %185 = vmatprep.subr.mxu0 0.0
    %186 = vmatpush1.msra.mxu0 0.0
    %187 = vmatprep.subr.mxu0 0.0
    %188 = vmatpush1.msra.mxu0 0.0
    %189 = vmatprep.mubr.f32.mxu0 0.0
    %190 = vmatmul.mubr.f32.gmra.mrb[0].mxu0 %v120
    %v191 = vpop.f32.mrb[0].mxu0
    %v192 = vadd.f32 %v116, %v191
    %v193 = vpop.f32.mrb[0].mxu0
    %194 = vmatprep.mubr.f32.mxu0 0.0
    %195 = vmatmul.mubr.f32.gmra.mrb[0].mxu0 %v123
    %v196 = vpop.f32.mrb[0].mxu0
    %v197 = vadd.f32 %v116, %v196
    %v198 = vpop.f32.mrb[0].mxu0
    %199 = vdwg.mxu0
    %v200 = vmax.f32 %v192, 0.0
    %v201 = vmax.f32 %v197, 0.0
    %vm202 = vcmask 261120
    %v204 = vsel %vm202, %v200, 0
    %v207 = vsel %vm202, %v201, 0
    %209 = vmatprep.subr.mxu0 0.0
    %210 = vmatpush1.msra.mxu0 %v23
    %211 = vmatprep.subr.mxu0 0.0
    %212 = vmatpush1.msra.mxu0 %v24
    %213 = vmatprep.subr.mxu0 0.0
    %214 = vmatpush1.msra.mxu0 %v25
    %215 = vmatprep.subr.mxu0 0.0
    %216 = vmatpush1.msra.mxu0 %v26
    %217 = vmatprep.subr.mxu0 0.0
    %218 = vmatpush1.msra.mxu0 0.0
    %219 = vmatprep.subr.mxu0 0.0
    %220 = vmatpush1.msra.mxu0 0.0
    %221 = vmatprep.subr.mxu0 0.0
    %222 = vmatpush1.msra.mxu0 0.0
    %223 = vmatprep.subr.mxu0 0.0
    %224 = vmatpush1.msra.mxu0 0.0
    %225 = vmatprep.subr.mxu0 0.0
    %226 = vmatpush1.msra.mxu0 0.0
    %227 = vmatprep.subr.mxu0 0.0
    %228 = vmatpush1.msra.mxu0 0.0
    %229 = vmatprep.subr.mxu0 0.0
    %230 = vmatpush1.msra.mxu0 0.0
    %231 = vmatprep.subr.mxu0 0.0
    %232 = vmatpush1.msra.mxu0 0.0
    %233 = vmatprep.subr.mxu0 0.0
    %234 = vmatpush1.msra.mxu0 0.0
    %235 = vmatprep.subr.mxu0 0.0
    %236 = vmatpush1.msra.mxu0 0.0
    %237 = vmatprep.subr.mxu0 0.0
    %238 = vmatpush1.msra.mxu0 0.0
    %239 = vmatprep.subr.mxu0 0.0
    %240 = vmatpush1.msra.mxu0 0.0
    %241 = vmatprep.subr.mxu0 0.0
    %242 = vmatpush1.msra.mxu0 0.0
    %243 = vmatprep.subr.mxu0 0.0
    %244 = vmatpush1.msra.mxu0 0.0
    %245 = vmatprep.subr.mxu0 0.0
    %246 = vmatpush1.msra.mxu0 0.0
    %247 = vmatprep.subr.mxu0 0.0
    %248 = vmatpush1.msra.mxu0 0.0
    %249 = vmatprep.subr.mxu0 0.0
    %250 = vmatpush1.msra.mxu0 0.0
    %251 = vmatprep.subr.mxu0 0.0
    %252 = vmatpush1.msra.mxu0 0.0
    %253 = vmatprep.subr.mxu0 0.0
    %254 = vmatpush1.msra.mxu0 0.0
    %255 = vmatprep.subr.mxu0 0.0
    %256 = vmatpush1.msra.mxu0 0.0
    %257 = vmatprep.subr.mxu0 0.0
    %258 = vmatpush1.msra.mxu0 0.0
    %259 = vmatprep.subr.mxu0 0.0
    %260 = vmatpush1.msra.mxu0 0.0
    %261 = vmatprep.subr.mxu0 0.0
    %262 = vmatpush1.msra.mxu0 0.0
    %263 = vmatprep.subr.mxu0 0.0
    %264 = vmatpush1.msra.mxu0 0.0
    %265 = vmatprep.subr.mxu0 0.0
    %266 = vmatpush1.msra.mxu0 0.0
    %267 = vmatprep.subr.mxu0 0.0
    %268 = vmatpush1.msra.mxu0 0.0
    %269 = vmatprep.subr.mxu0 0.0
    %270 = vmatpush1.msra.mxu0 0.0
    %271 = vmatprep.subr.mxu0 0.0
    %272 = vmatpush1.msra.mxu0 0.0
    %273 = vmatprep.mubr.f32.mxu0 0.0
    %274 = vmatmul.mubr.f32.gmra.mrb[0].mxu0 %v204
    %v275 = vpop.f32.mrb[0].mxu0
    %v276 = vadd.f32 0.0, %v275
    %v277 = vpop.f32.mrb[0].mxu0
    %278 = vmatprep.mubr.f32.mxu0 0.0
    %279 = vmatmul.mubr.f32.gmra.mrb[0].mxu0 %v207
    %v280 = vpop.f32.mrb[0].mxu0
    %v281 = vadd.f32 0.0, %v280
    %v282 = vpop.f32.mrb[0].mxu0
    %283 = vdwg.mxu0
    %284 = vrot.lane.b32.xlu0 %v116, 96
    %v285 = vpop.permute.xlu0 %284
    %287 = vmatprep.subr.mxu0 0.0
    %288 = vmatpush1.msra.mxu0 %v276
    %289 = vmatprep.subr.mxu0 0.0
    %290 = vmatpush1.msra.mxu0 %v281
    %291 = vmatprep.subr.mxu0 0.0
    %292 = vmatpush1.msra.mxu0 0.0
    %293 = vmatprep.subr.mxu0 0.0
    %294 = vmatpush1.msra.mxu0 0.0
    %295 = vmatprep.subr.mxu0 0.0
    %296 = vmatpush1.msra.mxu0 0.0
    %297 = vmatprep.subr.mxu0 0.0
    %298 = vmatpush1.msra.mxu0 0.0
    %299 = vmatprep.subr.mxu0 0.0
    %300 = vmatpush1.msra.mxu0 0.0
    %301 = vmatprep.subr.mxu0 0.0
    %302 = vmatpush1.msra.mxu0 0.0
    %303 = vmatprep.subr.mxu0 0.0
    %304 = vmatpush1.msra.mxu0 0.0
    %305 = vmatprep.subr.mxu0 0.0
    %306 = vmatpush1.msra.mxu0 0.0
    %307 = vmatprep.subr.mxu0 0.0
    %308 = vmatpush1.msra.mxu0 0.0
    %309 = vmatprep.subr.mxu0 0.0
    %310 = vmatpush1.msra.mxu0 0.0
    %311 = vmatprep.subr.mxu0 0.0
    %312 = vmatpush1.msra.mxu0 0.0
    %313 = vmatprep.subr.mxu0 0.0
    %314 = vmatpush1.msra.mxu0 0.0
    %315 = vmatprep.subr.mxu0 0.0
    %316 = vmatpush1.msra.mxu0 0.0
    %317 = vmatprep.subr.mxu0 0.0
    %318 = vmatpush1.msra.mxu0 0.0
    %319 = vmatprep.subr.mxu0 0.0
    %320 = vmatpush1.msra.mxu0 0.0
    %321 = vmatprep.subr.mxu0 0.0
    %322 = vmatpush1.msra.mxu0 0.0
    %323 = vmatprep.subr.mxu0 0.0
    %324 = vmatpush1.msra.mxu0 0.0
    %325 = vmatprep.subr.mxu0 0.0
    %326 = vmatpush1.msra.mxu0 0.0
    %327 = vmatprep.subr.mxu0 0.0
    %328 = vmatpush1.msra.mxu0 0.0
    %329 = vmatprep.subr.mxu0 0.0
    %330 = vmatpush1.msra.mxu0 0.0
    %331 = vmatprep.subr.mxu0 0.0
    %332 = vmatpush1.msra.mxu0 0.0
    %333 = vmatprep.subr.mxu0 0.0
    %334 = vmatpush1.msra.mxu0 0.0
    %335 = vmatprep.subr.mxu0 0.0
    %336 = vmatpush1.msra.mxu0 0.0
    %337 = vmatprep.subr.mxu0 0.0
    %338 = vmatpush1.msra.mxu0 0.0
    %339 = vmatprep.subr.mxu0 0.0
    %340 = vmatpush1.msra.mxu0 0.0
    %341 = vmatprep.subr.mxu0 0.0
    %342 = vmatpush1.msra.mxu0 0.0
    %343 = vmatprep.subr.mxu0 0.0
    %344 = vmatpush1.msra.mxu0 0.0
    %345 = vmatprep.subr.mxu0 0.0
    %346 = vmatpush1.msra.mxu0 0.0
    %347 = vmatprep.subr.mxu0 0.0
    %348 = vmatpush1.msra.mxu0 0.0
    %349 = vmatprep.subr.mxu0 0.0
    %350 = vmatpush1.msra.mxu0 0.0
    %351 = vmatprep.mubr.f32.mxu0 0.0
    %352 = vmatmul.mubr.f32.gmra.mrb[0].mxu0 %v32
    %v353 = vpop.f32.mrb[0].mxu0
    %v354 = vadd.f32 %v285, %v353
    %v355 = vpop.f32.mrb[0].mxu0
    %356 = vmatprep.mubr.f32.mxu0 0.0
    %357 = vmatmul.mubr.f32.gmra.mrb[0].mxu0 %v35
    %v358 = vpop.f32.mrb[0].mxu0
    %v359 = vadd.f32 %v285, %v358
    %v360 = vpop.f32.mrb[0].mxu0
    %361 = vdwg.mxu0
    %v362 = vmax.f32 %v354, 0.0
    %v363 = vmax.f32 %v359, 0.0
    %v364 = vsel %vm30, %v362, 0.0
    %v365 = vsel %vm30, %v363, 0.0
    %v366 = vadd.f32 %v364, %v365
    %v367 = vrot.slane %v366, 4
    %v368 = vadd.f32 %v366, %v367
    %v369 = vrot.slane %v368, 2
    %v370 = vadd.f32 %v368, %v369
    %v371 = vrot.slane %v370, 1
    %v372 = vadd.f32 %v370, %v371
    %373 = vrot.lane.b32.xlu0 %v116, 80
    %v374 = vpop.permute.xlu0 %373
    %v377 = vsel %vm30, %v372, 0
    %379 = vmatprep.subr.mxu0 0.0
    %380 = vmatpush1.msra.mxu0 %v27
    %381 = vmatprep.subr.mxu0 0.0
    %382 = vmatpush1.msra.mxu0 %v28
    %383 = vmatprep.subr.mxu0 0.0
    %384 = vmatpush1.msra.mxu0 0.0
    %385 = vmatprep.subr.mxu0 0.0
    %386 = vmatpush1.msra.mxu0 0.0
    %387 = vmatprep.subr.mxu0 0.0
    %388 = vmatpush1.msra.mxu0 0.0
    %389 = vmatprep.subr.mxu0 0.0
    %390 = vmatpush1.msra.mxu0 0.0
    %391 = vmatprep.subr.mxu0 0.0
    %392 = vmatpush1.msra.mxu0 0.0
    %393 = vmatprep.subr.mxu0 0.0
    %394 = vmatpush1.msra.mxu0 0.0
    %395 = vmatprep.subr.mxu0 0.0
    %396 = vmatpush1.msra.mxu0 0.0
    %397 = vmatprep.subr.mxu0 0.0
    %398 = vmatpush1.msra.mxu0 0.0
    %399 = vmatprep.subr.mxu0 0.0
    %400 = vmatpush1.msra.mxu0 0.0
    %401 = vmatprep.subr.mxu0 0.0
    %402 = vmatpush1.msra.mxu0 0.0
    %403 = vmatprep.subr.mxu0 0.0
    %404 = vmatpush1.msra.mxu0 0.0
    %405 = vmatprep.subr.mxu0 0.0
    %406 = vmatpush1.msra.mxu0 0.0
    %407 = vmatprep.subr.mxu0 0.0
    %408 = vmatpush1.msra.mxu0 0.0
    %409 = vmatprep.subr.mxu0 0.0
    %410 = vmatpush1.msra.mxu0 0.0
    %411 = vmatprep.subr.mxu0 0.0
    %412 = vmatpush1.msra.mxu0 0.0
    %413 = vmatprep.subr.mxu0 0.0
    %414 = vmatpush1.msra.mxu0 0.0
    %415 = vmatprep.subr.mxu0 0.0
    %416 = vmatpush1.msra.mxu0 0.0
    %417 = vmatprep.subr.mxu0 0.0
    %418 = vmatpush1.msra.mxu0 0.0
    %419 = vmatprep.subr.mxu0 0.0
    %420 = vmatpush1.msra.mxu0 0.0
    %421 = vmatprep.subr.mxu0 0.0
    %422 = vmatpush1.msra.mxu0 0.0
    %423 = vmatprep.subr.mxu0 0.0
    %424 = vmatpush1.msra.mxu0 0.0
    %425 = vmatprep.subr.mxu0 0.0
    %426 = vmatpush1.msra.mxu0 0.0
    %427 = vmatprep.subr.mxu0 0.0
    %428 = vmatpush1.msra.mxu0 0.0
    %429 = vmatprep.subr.mxu0 0.0
    %430 = vmatpush1.msra.mxu0 0.0
    %431 = vmatprep.subr.mxu0 0.0
    %432 = vmatpush1.msra.mxu0 0.0
    %433 = vmatprep.subr.mxu0 0.0
    %434 = vmatpush1.msra.mxu0 0.0
    %435 = vmatprep.subr.mxu0 0.0
    %436 = vmatpush1.msra.mxu0 0.0
    %437 = vmatprep.subr.mxu0 0.0
    %438 = vmatpush1.msra.mxu0 0.0
    %439 = vmatprep.subr.mxu0 0.0
    %440 = vmatpush1.msra.mxu0 0.0
    %441 = vmatprep.subr.mxu0 0.0
    %442 = vmatpush1.msra.mxu0 0.0
    %443 = vmatprep.mubr.f32.mxu0 0.0
    %444 = vmatmul.mubr.f32.gmra.mrb[0].mxu0 %v377
    %v445 = vpop.f32.mrb[0].mxu0
    %v446 = vadd.f32 %v374, %v445
    %v447 = vpop.f32.mrb[0].mxu0
    %448 = vdwg.mxu0
    %vm449 = vcmask 24576
    %450 = vst.msk [vmem:[#allocation2] sm:$0x1] %vm449, %v446
    // Predicated region
    $region18: #{tpu_custom_call.1} parent=1 // pred_check
      _
    $region19: #{tpu_custom_call.1} parent=1 // pred_check_branch
      %452 = sbr.rel (0) target = $region21
    $region20: #{tpu_custom_call.1} parent=1 // pred_region
      %s454 = ssub.s32 16, 16
      %455 = vsyncadd [#allocation3], %s454
      %s457 = sshll.u32 [#allocation2], 4
      %s458 = int_to_ptr.vmem [resolvable:$true] %s457
      %460 = dma.vmem_to_hbm [thread:$0]  %s458, 16, %s4, [#allocation3]
    $region21: #{tpu_custom_call.1} parent=1 // pred_fallthru
      _
    // Predicated region
    $region22: #{tpu_custom_call.1} parent=1 // pred_check
      _
    $region23: #{tpu_custom_call.1} parent=1 // pred_check_branch
      %462 = sbr.rel (0) target = $region25
    $region24: #{tpu_custom_call.1} parent=1 // pred_region
      %463 = dma.done [#allocation3], 16
    $region25: #{tpu_custom_call.1} parent=1 // pred_fallthru
      _
    %464 = vsyncpa [#allocation3], 1

</llo_original>
